<compile_context>
chip_gen: v7x
topology: tpu7x:2x2x1
jax: 0.10.0
libtpu: 0.0.40
codegen_flags: <defaults>
</compile_context>

<pallas_src>
import functools
import math

import jax
import jax.numpy as jnp
from jax import lax
from jax.experimental import pallas as pl
from jax.experimental.pallas import tpu as pltpu

_LANE = 128
_HALF_LOG_2PI = 0.5 * math.log(2.0 * math.pi)


def _round_up(x, m):
    return ((x + m - 1) // m) * m


# ----------------------------------------------------------------------------
# Fused kernel: MLP (all layers) + Gaussian sample + log-probs
# ----------------------------------------------------------------------------
def _fused_policy_kernel(*refs, n_layers: int, action_dim: int, has_a: bool):
    # refs layout:
    #   inputs : x, (w_i, b_i) * n_layers, log_std, eps, [a]
    #   outputs: pi_out (TB, A_pad), logp_out (TB, 128)
    idx = 0
    x_ref = refs[idx]; idx += 1
    wb_refs = refs[idx: idx + 2 * n_layers]; idx += 2 * n_layers
    logstd_ref = refs[idx]; idx += 1
    eps_ref = refs[idx]; idx += 1
    if has_a:
        a_ref = refs[idx]; idx += 1
    pi_ref = refs[idx]; idx += 1
    logp_ref = refs[idx]; idx += 1

    # ---- MLP: tanh on hidden layers, identity on output layer ----
    h = x_ref[...]
    for i in range(n_layers):
        w = wb_refs[2 * i][...]
        b = wb_refs[2 * i + 1][...]            # (1, dout) -> broadcasts over batch
        h = jnp.dot(h, w, preferred_element_type=jnp.float32) + b
        if i < n_layers - 1:
            h = jnp.tanh(h)
    mu = h                                     # (TB, A_pad); padded lanes are exactly 0

    # ---- Gaussian head ----
    log_std = logstd_ref[...]                  # (1, A_pad); padded lanes are 0
    std = jnp.exp(log_std)
    inv_std = jnp.exp(-log_std)                # folded: no reciprocal needed

    eps = eps_ref[...]
    pi = mu + std * eps                        # padded lanes: 0 + 1*0 = 0
    pi_ref[...] = pi.astype(pi_ref.dtype)

    # log_prob summed over action dim:
    #   sum_j(-0.5*z_j^2 - log_std_j - 0.5*log(2*pi)) = -0.5*sum(z^2) + C
    # Padded lanes of log_std are 0 so sum(log_std) is over the real A lanes only,
    # and the 0.5*log(2*pi) term is scaled by the real action_dim (static).
    c = -jnp.sum(log_std) - jnp.float32(action_dim * _HALF_LOG_2PI)

    z_pi = (pi - mu) * inv_std                 # padded lanes contribute 0
    lp_pi = -0.5 * jnp.sum(z_pi * z_pi, axis=-1, keepdims=True) + c
    if has_a:
        z_a = (a_ref[...] - mu) * inv_std
        lp_a = -0.5 * jnp.sum(z_a * z_a, axis=-1, keepdims=True) + c
    else:
        lp_a = jnp.zeros_like(lp_pi)

    # Lane-dense merged output: lane 0 = logp_pi, lane 1 = logp(a), rest 0.
    lane = lax.broadcasted_iota(jnp.int32, logp_ref.shape, 1)
    logp_ref[...] = jnp.where(lane == 0, lp_pi,
                              jnp.where(lane == 1, lp_a, 0.0))


# ----------------------------------------------------------------------------
# Wrapper
# ----------------------------------------------------------------------------
def gaussian_policy_forward(params, log_std, x, a=None, *, sample_key=None,
                            batch_tile=512):
    """Returns (pi, logp, logp_pi) exactly like GaussianPolicy.forward."""
    B, Din = x.shape
    n_layers = len(params)
    A = params[-1][0].shape[1]
    A_pad = _round_up(A, _LANE)

    if sample_key is None:
        sample_key = jax.random.PRNGKey(0)     # TODO(synk): deterministic default "sampling"
    eps = jax.random.normal(sample_key, (B, A), dtype=jnp.float32)

    # --- batch tiling (pad batch to a multiple of the tile; tile <= batch_tile) ---
    B8 = _round_up(B, 8)
    TB = min(B8, batch_tile)
    B_pad = _round_up(B8, TB)
    grid = (B_pad // TB,)

    def pad2(arr, rows, cols):
        return jnp.pad(arr, ((0, rows - arr.shape[0]), (0, cols - arr.shape[1])))

    x_p = pad2(x.astype(jnp.float32), B_pad, Din)
    eps_p = pad2(eps, B_pad, A_pad)
    log_std_p = pad2(log_std.reshape(1, A).astype(jnp.float32), 1, A_pad)

    has_a = a is not None
    if has_a:
        a_p = pad2(a.astype(jnp.float32), B_pad, A_pad)

    # Pad the LAST layer's weight columns / bias to the lane-padded action dim so
    # mu comes out of the matmul already 128-lane wide with zero padding.
    wb_inputs = []
    wb_specs = []
    const_map = lambda i: (0, 0)
    for li, (w, b) in enumerate(params):
        w = w.astype(jnp.float32)
        b = b.reshape(1, -1).astype(jnp.float32)
        if li == n_layers - 1:
            w = pad2(w, w.shape[0], A_pad)
            b = pad2(b, 1, A_pad)
        wb_inputs += [w, b]
        wb_specs += [pl.BlockSpec(w.shape, const_map),
                     pl.BlockSpec(b.shape, const_map)]

    batch_map = lambda i: (i, 0)
    in_specs = ([pl.BlockSpec((TB, Din), batch_map)]
                + wb_specs
                + [pl.BlockSpec((1, A_pad), const_map),
                   pl.BlockSpec((TB, A_pad), batch_map)]
                + ([pl.BlockSpec((TB, A_pad), batch_map)] if has_a else []))
    inputs = ([x_p] + wb_inputs + [log_std_p, eps_p]
              + ([a_p] if has_a else []))

    out_shape = (
        jax.ShapeDtypeStruct((B_pad, A_pad), jnp.float32),   # pi (lane-padded)
        jax.ShapeDtypeStruct((B_pad, _LANE), jnp.float32),   # [logp_pi, logp, 0...]
    )
    out_specs = (
        pl.BlockSpec((TB, A_pad), batch_map),
        pl.BlockSpec((TB, _LANE), batch_map),
    )

    kernel = functools.partial(_fused_policy_kernel,
                               n_layers=n_layers, action_dim=A, has_a=has_a)

    pi_pad, logp_pad = pl.pallas_call(
        kernel,
        out_shape=out_shape,
        grid=grid,
        in_specs=in_specs,
        out_specs=out_specs,
        compiler_params=pltpu.CompilerParams(
            dimension_semantics=("parallel",)),
    )(*inputs)

    pi = pi_pad[:B, :A]
    logp_pi = logp_pad[:B, 0]
    logp = logp_pad[:B, 1] if has_a else None
    return pi, logp, logp_pi


# ----------------------------------------------------------------------------
# Deterministic parameter construction
# ----------------------------------------------------------------------------
def init_params(key, layer_dims):
    """Weights ~ uniform(-1/sqrt(fan_in), 1/sqrt(fan_in)); biases zero (as in module)."""
    params = []
    for din, dout in zip(layer_dims[:-1], layer_dims[1:]):
        key, sub = jax.random.split(key)
        bound = 1.0 / jnp.sqrt(jnp.float32(din))
        w = jax.random.uniform(sub, (din, dout), jnp.float32, -bound, bound)
        b = jnp.zeros((1, dout), jnp.float32)
        params.append((w, b))
    return params


# ----------------------------------------------------------------------------
# Main
# ----------------------------------------------------------------------------
if __name__ == "__main__":
    key = jax.random.PRNGKey(0)
    k_param, k_x, k_a, k_eps = jax.random.split(key, 4)

    batch = 8
    input_dim = 32
    hidden_dims = (64, 64)
    action_dim = 8

    layer_dims = [input_dim] + list(hidden_dims) + [action_dim]
    params = init_params(k_param, layer_dims)
    log_std = -0.5 * jnp.ones((action_dim,), jnp.float32)

    x = jax.random.normal(k_x, (batch, input_dim), jnp.float32)
    a = jax.random.normal(k_a, (batch, action_dim), jnp.float32)

    pi, logp, logp_pi = gaussian_policy_forward(
        params, log_std, x, a, sample_key=k_eps)
    jax.block_until_ready((pi, logp, logp_pi))

    # Also exercise the a=None variant (logp must be None).
    pi2, logp2, logp_pi2 = gaussian_policy_forward(
        params, log_std, x, None, sample_key=k_eps)
    jax.block_until_ready((pi2, logp_pi2))
    assert logp2 is None

    # Sanity check against a pure-JAX reference of the same math.
    def ref_forward(x, a, eps):
        h = x
        for i, (w, b) in enumerate(params):
            h = h @ w + b
            if i < len(params) - 1:
                h = jnp.tanh(h)
        mu = h
        std = jnp.exp(log_std)
        pi_r = mu + std * eps
        def lp(v):
            return jnp.sum(-((v - mu) ** 2) / (2 * std ** 2)
                           - log_std - 0.5 * jnp.log(2 * jnp.pi), axis=1)
        return pi_r, lp(a), lp(pi_r)

    eps = jax.random.normal(k_eps, (batch, action_dim), jnp.float32)
    pi_r, logp_r, logp_pi_r = ref_forward(x, a, eps)
    assert jnp.allclose(pi, pi_r, atol=1e-4), "pi mismatch"
    assert jnp.allclose(logp, logp_r, atol=1e-4), "logp mismatch"
    assert jnp.allclose(logp_pi, logp_pi_r, atol=1e-4), "logp_pi mismatch"
    assert jnp.allclose(pi2, pi_r, atol=1e-4), "pi (a=None) mismatch"
    assert jnp.allclose(logp_pi2, logp_pi_r, atol=1e-4), "logp_pi (a=None) mismatch"

    print("KERNEL_OK")
</pallas_src>

<mosaic_0001>
module attributes {stable_mosaic.version = 11 : i64} {
  func.func @_fused_policy_kernel(%arg0: i32, %arg1: memref<8x32xf32, #tpu.memory_space<vmem>>, %arg2: memref<32x64xf32, #tpu.memory_space<vmem>>, %arg3: memref<1x64xf32, #tpu.memory_space<vmem>>, %arg4: memref<64x64xf32, #tpu.memory_space<vmem>>, %arg5: memref<1x64xf32, #tpu.memory_space<vmem>>, %arg6: memref<64x128xf32, #tpu.memory_space<vmem>>, %arg7: memref<1x128xf32, #tpu.memory_space<vmem>>, %arg8: memref<1x128xf32, #tpu.memory_space<vmem>>, %arg9: memref<8x128xf32, #tpu.memory_space<vmem>>, %arg10: memref<8x128xf32, #tpu.memory_space<vmem>>, %arg11: memref<8x128xf32, #tpu.memory_space<vmem>>, %arg12: memref<8x128xf32, #tpu.memory_space<vmem>>) attributes {dimension_semantics = [#tpu.dimension_semantics<parallel>], iteration_bounds = array<i64: 1>, scalar_prefetch = 0 : i64, scratch_operands = 0 : i64, tpu.core_type = #tpu.core_type<tc>, window_params = [{transform_indices = @transform_0, window_bounds = array<i64: 8, 32>}, {pipeline_mode = #tpu.pipeline_mode<synchronous>, transform_indices = @transform_1, window_bounds = array<i64: 32, 64>}, {pipeline_mode = #tpu.pipeline_mode<synchronous>, transform_indices = @transform_2, window_bounds = array<i64: 1, 64>}, {pipeline_mode = #tpu.pipeline_mode<synchronous>, transform_indices = @transform_3, window_bounds = array<i64: 64, 64>}, {pipeline_mode = #tpu.pipeline_mode<synchronous>, transform_indices = @transform_4, window_bounds = array<i64: 1, 64>}, {pipeline_mode = #tpu.pipeline_mode<synchronous>, transform_indices = @transform_5, window_bounds = array<i64: 64, 128>}, {pipeline_mode = #tpu.pipeline_mode<synchronous>, transform_indices = @transform_6, window_bounds = array<i64: 1, 128>}, {pipeline_mode = #tpu.pipeline_mode<synchronous>, transform_indices = @transform_7, window_bounds = array<i64: 1, 128>}, {transform_indices = @transform_8, window_bounds = array<i64: 8, 128>}, {transform_indices = @transform_9, window_bounds = array<i64: 8, 128>}, {transform_indices = @transform_10, window_bounds = array<i64: 8, 128>}, {transform_indices = @transform_11, window_bounds = array<i64: 8, 128>}]} {
    %c0 = arith.constant 0 : index
    %c0_0 = arith.constant 0 : index
    %0 = vector.load %arg1[%c0, %c0_0] : memref<8x32xf32, #tpu.memory_space<vmem>>, vector<8x32xf32>
    %c0_1 = arith.constant 0 : index
    %c0_2 = arith.constant 0 : index
    %1 = vector.load %arg2[%c0_1, %c0_2] : memref<32x64xf32, #tpu.memory_space<vmem>>, vector<32x64xf32>
    %c0_3 = arith.constant 0 : index
    %c0_4 = arith.constant 0 : index
    %2 = vector.load %arg3[%c0_3, %c0_4] : memref<1x64xf32, #tpu.memory_space<vmem>>, vector<1x64xf32>
    %cst = arith.constant dense<0.000000e+00> : vector<8x64xf32>
    %3 = tpu.matmul %0, %1, %cst {dimension_numbers = #tpu.dot_dimension_numbers<[1], [0], [0], [1], [0, 0, 1, 1], [], []>} : vector<8x32xf32>, vector<32x64xf32>, vector<8x64xf32> -> vector<8x64xf32>
    %4 = vector.broadcast %2 : vector<1x64xf32> to vector<8x64xf32>
    %5 = arith.addf %3, %4 : vector<8x64xf32>
    %6 = math.tanh %5 : vector<8x64xf32>
    %c0_5 = arith.constant 0 : index
    %c0_6 = arith.constant 0 : index
    %7 = vector.load %arg4[%c0_5, %c0_6] : memref<64x64xf32, #tpu.memory_space<vmem>>, vector<64x64xf32>
    %c0_7 = arith.constant 0 : index
    %c0_8 = arith.constant 0 : index
    %8 = vector.load %arg5[%c0_7, %c0_8] : memref<1x64xf32, #tpu.memory_space<vmem>>, vector<1x64xf32>
    %cst_9 = arith.constant dense<0.000000e+00> : vector<8x64xf32>
    %9 = tpu.matmul %6, %7, %cst_9 {dimension_numbers = #tpu.dot_dimension_numbers<[1], [0], [0], [1], [0, 0, 1, 1], [], []>} : vector<8x64xf32>, vector<64x64xf32>, vector<8x64xf32> -> vector<8x64xf32>
    %10 = vector.broadcast %8 : vector<1x64xf32> to vector<8x64xf32>
    %11 = arith.addf %9, %10 : vector<8x64xf32>
    %12 = math.tanh %11 : vector<8x64xf32>
    %c0_10 = arith.constant 0 : index
    %c0_11 = arith.constant 0 : index
    %13 = vector.load %arg6[%c0_10, %c0_11] : memref<64x128xf32, #tpu.memory_space<vmem>>, vector<64x128xf32>
    %c0_12 = arith.constant 0 : index
    %c0_13 = arith.constant 0 : index
    %14 = vector.load %arg7[%c0_12, %c0_13] : memref<1x128xf32, #tpu.memory_space<vmem>>, vector<1x128xf32>
    %cst_14 = arith.constant dense<0.000000e+00> : vector<8x128xf32>
    %15 = tpu.matmul %12, %13, %cst_14 {dimension_numbers = #tpu.dot_dimension_numbers<[1], [0], [0], [1], [0, 0, 1, 1], [], []>} : vector<8x64xf32>, vector<64x128xf32>, vector<8x128xf32> -> vector<8x128xf32>
    %16 = vector.broadcast %14 : vector<1x128xf32> to vector<8x128xf32>
    %17 = arith.addf %15, %16 : vector<8x128xf32>
    %c0_15 = arith.constant 0 : index
    %c0_16 = arith.constant 0 : index
    %18 = vector.load %arg8[%c0_15, %c0_16] : memref<1x128xf32, #tpu.memory_space<vmem>>, vector<1x128xf32>
    %19 = math.exp %18 : vector<1x128xf32>
    %cst_17 = arith.constant 0.000000e+00 : f32
    %20 = vector.broadcast %cst_17 : f32 to vector<1x128xf32>
    %21 = arith.subf %20, %18 : vector<1x128xf32>
    %22 = math.exp %21 : vector<1x128xf32>
    %c0_18 = arith.constant 0 : index
    %c0_19 = arith.constant 0 : index
    %23 = vector.load %arg9[%c0_18, %c0_19] : memref<8x128xf32, #tpu.memory_space<vmem>>, vector<8x128xf32>
    %24 = vector.broadcast %19 : vector<1x128xf32> to vector<8x128xf32>
    %25 = arith.mulf %24, %23 : vector<8x128xf32>
    %26 = arith.addf %17, %25 : vector<8x128xf32>
    %c0_20 = arith.constant 0 : index
    %c0_21 = arith.constant 0 : index
    %27 = vector.load %arg11[%c0_20, %c0_21] : memref<8x128xf32, #tpu.memory_space<vmem>>, vector<8x128xf32>
    tpu.vector_store %arg11[%c0_20, %c0_21], %26 {strides = array<i32>} : memref<8x128xf32, #tpu.memory_space<vmem>>, vector<8x128xf32>,
    %28 = vector.shape_cast %18 : vector<1x128xf32> to vector<1x1x128xf32>
    %cst_22 = arith.constant dense<0.000000e+00> : vector<1xf32>
    %29 = vector.multi_reduction <add>, %28, %cst_22 [1, 2] : vector<1x1x128xf32> to vector<1xf32>
    %30 = vector.shape_cast %29 : vector<1xf32> to vector<1x1x1xf32>
    %31 = vector.extract %30[0, 0, 0] : f32 from vector<1x1x1xf32>
    %cst_23 = arith.constant 0.000000e+00 : f32
    %32 = arith.subf %cst_23, %31 : f32
    %cst_24 = arith.constant 7.35150814 : f32
    %33 = arith.subf %32, %cst_24 : f32
    %34 = arith.subf %26, %17 : vector<8x128xf32>
    %35 = vector.broadcast %22 : vector<1x128xf32> to vector<8x128xf32>
    %36 = arith.mulf %34, %35 : vector<8x128xf32>
    %37 = arith.mulf %36, %36 : vector<8x128xf32>
    %cst_25 = arith.constant dense<0.000000e+00> : vector<8xf32>
    %38 = vector.multi_reduction <add>, %37, %cst_25 [1] : vector<8x128xf32> to vector<8xf32>
    %39 = vector.shape_cast %38 : vector<8xf32> to vector<8x1xf32>
    %cst_26 = arith.constant -5.000000e-01 : f32
    %40 = vector.broadcast %cst_26 : f32 to vector<8x1xf32>
    %41 = arith.mulf %40, %39 : vector<8x1xf32>
    %42 = vector.broadcast %33 : f32 to vector<8x1xf32>
    %43 = arith.addf %41, %42 : vector<8x1xf32>
    %c0_27 = arith.constant 0 : index
    %c0_28 = arith.constant 0 : index
    %44 = vector.load %arg10[%c0_27, %c0_28] : memref<8x128xf32, #tpu.memory_space<vmem>>, vector<8x128xf32>
    %45 = arith.subf %44, %17 : vector<8x128xf32>
    %46 = vector.broadcast %22 : vector<1x128xf32> to vector<8x128xf32>
    %47 = arith.mulf %45, %46 : vector<8x128xf32>
    %48 = arith.mulf %47, %47 : vector<8x128xf32>
    %cst_29 = arith.constant dense<0.000000e+00> : vector<8xf32>
    %49 = vector.multi_reduction <add>, %48, %cst_29 [1] : vector<8x128xf32> to vector<8xf32>
    %50 = vector.shape_cast %49 : vector<8xf32> to vector<8x1xf32>
    %cst_30 = arith.constant -5.000000e-01 : f32
    %51 = vector.broadcast %cst_30 : f32 to vector<8x1xf32>
    %52 = arith.mulf %51, %50 : vector<8x1xf32>
    %53 = vector.broadcast %33 : f32 to vector<8x1xf32>
    %54 = arith.addf %52, %53 : vector<8x1xf32>
    %55 = tpu.iota {dimensions = array<i32: 1>} : vector<8x128xi32>
    %c0_i32 = arith.constant 0 : i32
    %56 = vector.broadcast %c0_i32 : i32 to vector<8x128xi32>
    %57 = arith.cmpi eq, %55, %56 : vector<8x128xi32>
    %c1_i32 = arith.constant 1 : i32
    %58 = vector.broadcast %c1_i32 : i32 to vector<8x128xi32>
    %59 = arith.cmpi eq, %55, %58 : vector<8x128xi32>
    %cst_31 = arith.constant 0.000000e+00 : f32
    %60 = vector.shape_cast %54 : vector<8x1xf32> to vector<8x1xf32>
    %61 = vector.broadcast %60 : vector<8x1xf32> to vector<8x128xf32>
    %62 = vector.broadcast %cst_31 : f32 to vector<8x128xf32>
    %63 = arith.select %59, %61, %62 : vector<8x128xi1>, vector<8x128xf32>
    %64 = vector.shape_cast %43 : vector<8x1xf32> to vector<8x1xf32>
    %65 = vector.broadcast %64 : vector<8x1xf32> to vector<8x128xf32>
    %66 = arith.select %57, %65, %63 : vector<8x128xi1>, vector<8x128xf32>
    %c0_32 = arith.constant 0 : index
    %c0_33 = arith.constant 0 : index
    %67 = vector.load %arg12[%c0_32, %c0_33] : memref<8x128xf32, #tpu.memory_space<vmem>>, vector<8x128xf32>
    tpu.vector_store %arg12[%c0_32, %c0_33], %66 {strides = array<i32>} : memref<8x128xf32, #tpu.memory_space<vmem>>, vector<8x128xf32>,
    return
  }
  func.func @transform_0(%arg0: i32) -> (i32, i32) {
    %c0_i32 = arith.constant 0 : i32
    %c0_i32_0 = arith.constant 0 : i32
    return %arg0, %c0_i32 : i32, i32
  }
  func.func @transform_1(%arg0: i32) -> (i32, i32) {
    %c0_i32 = arith.constant 0 : i32
    %c0_i32_0 = arith.constant 0 : i32
    %c0_i32_1 = arith.constant 0 : i32
    return %c0_i32, %c0_i32_0 : i32, i32
  }
  func.func @transform_2(%arg0: i32) -> (i32, i32) {
    %c0_i32 = arith.constant 0 : i32
    %c0_i32_0 = arith.constant 0 : i32
    %c0_i32_1 = arith.constant 0 : i32
    return %c0_i32, %c0_i32_0 : i32, i32
  }
  func.func @transform_3(%arg0: i32) -> (i32, i32) {
    %c0_i32 = arith.constant 0 : i32
    %c0_i32_0 = arith.constant 0 : i32
    %c0_i32_1 = arith.constant 0 : i32
    return %c0_i32, %c0_i32_0 : i32, i32
  }
  func.func @transform_4(%arg0: i32) -> (i32, i32) {
    %c0_i32 = arith.constant 0 : i32
    %c0_i32_0 = arith.constant 0 : i32
    %c0_i32_1 = arith.constant 0 : i32
    return %c0_i32, %c0_i32_0 : i32, i32
  }
  func.func @transform_5(%arg0: i32) -> (i32, i32) {
    %c0_i32 = arith.constant 0 : i32
    %c0_i32_0 = arith.constant 0 : i32
    %c0_i32_1 = arith.constant 0 : i32
    return %c0_i32, %c0_i32_0 : i32, i32
  }
  func.func @transform_6(%arg0: i32) -> (i32, i32) {
    %c0_i32 = arith.constant 0 : i32
    %c0_i32_0 = arith.constant 0 : i32
    %c0_i32_1 = arith.constant 0 : i32
    return %c0_i32, %c0_i32_0 : i32, i32
  }
  func.func @transform_7(%arg0: i32) -> (i32, i32) {
    %c0_i32 = arith.constant 0 : i32
    %c0_i32_0 = arith.constant 0 : i32
    %c0_i32_1 = arith.constant 0 : i32
    return %c0_i32, %c0_i32_0 : i32, i32
  }
  func.func @transform_8(%arg0: i32) -> (i32, i32) {
    %c0_i32 = arith.constant 0 : i32
    %c0_i32_0 = arith.constant 0 : i32
    return %arg0, %c0_i32 : i32, i32
  }
  func.func @transform_9(%arg0: i32) -> (i32, i32) {
    %c0_i32 = arith.constant 0 : i32
    %c0_i32_0 = arith.constant 0 : i32
    return %arg0, %c0_i32 : i32, i32
  }
  func.func @transform_10(%arg0: i32) -> (i32, i32) {
    %c0_i32 = arith.constant 0 : i32
    %c0_i32_0 = arith.constant 0 : i32
    return %arg0, %c0_i32 : i32, i32
  }
  func.func @transform_11(%arg0: i32) -> (i32, i32) {
    %c0_i32 = arith.constant 0 : i32
    %c0_i32_0 = arith.constant 0 : i32
    return %arg0, %c0_i32 : i32, i32
  }
}

</mosaic_0001>

<llo_original>
// kernel: tpu_custom_call.1
$region0: #{tpu_custom_call.1}
  #allocation0 [shape = 'u32[]', space=smem, size = 0x4, offset = 0x4, fixed_abs, tag = 'smem constant byte address 0x4 - core index']
  #allocation1 [shape = 'u32[144,128]{1,0:T(1,128)}', space=vmem, size = 0x12000, scoped, tag = 'internal scratch']
  %s0 = inlined_call_operand.hbm [shape: f32[8,32], index: 0, kind: input, shape index: {}]
  %s1 = inlined_call_operand.hbm [shape: f32[32,64], index: 1, kind: input, shape index: {}]
  %s2 = inlined_call_operand.vmem [shape: f32[1,64], index: 2, kind: input, shape index: {}]
  %s3 = inlined_call_operand.hbm [shape: f32[64,64], index: 3, kind: input, shape index: {}]
  %s4 = inlined_call_operand.vmem [shape: f32[1,64], index: 4, kind: input, shape index: {}]
  %s5 = inlined_call_operand.hbm [shape: f32[64,128], index: 5, kind: input, shape index: {}]
  %s6 = inlined_call_operand.vmem [shape: f32[1,128], index: 6, kind: input, shape index: {}]
  %s7 = inlined_call_operand.vmem [shape: f32[1,128], index: 7, kind: input, shape index: {}]
  %s8 = inlined_call_operand.vmem [shape: f32[8,128], index: 8, kind: input, shape index: {}]
  %s9 = inlined_call_operand.vmem [shape: f32[8,128], index: 9, kind: input, shape index: {}]
  %s10 = inlined_call_operand.hbm [shape: f32[8,128], index: 10, kind: output, shape index: {0}]
  %s11 = inlined_call_operand.hbm [shape: f32[8,128], index: 11, kind: output, shape index: {1}]
  %12 = xla_tuple %s10, %s11
  %s13 = sld [smem:[#allocation0]]
  $region74: #{tpu_custom_call.1} parent=0
    _
  %s15 = ssub.s32 1, %s13
  %s16 = scalar_select 0, %s15, %s13
  $region1: #{tpu_custom_call.1} parent=0
    #allocation2 [shape = 'u8[4096]{0}', space=vmem, size = 0x1000, scoped, tag = 'input window, operand 0, single buffered']
    #allocation3 [shape = 's32[1]{0}', space=sflag, size = 0x4, scoped, tag = 'scoped memory for tpu_custom_call.1']
    #allocation4 [shape = 's32[1]{0}', space=sflag, size = 0x4, scoped, tag = 'scoped memory for tpu_custom_call.1']
    #allocation5 [shape = 'u8[16384]{0}', space=vmem, size = 0x4000, scoped, tag = 'input window, operand 1, single buffered']
    #allocation6 [shape = 's32[1]{0}', space=sflag, size = 0x4, scoped, tag = 'scoped memory for tpu_custom_call.1']
    #allocation7 [shape = 'u8[32768]{0}', space=vmem, size = 0x8000, scoped, tag = 'input window, operand 3, single buffered']
    #allocation8 [shape = 'u8[32768]{0}', space=vmem, size = 0x8000, scoped, tag = 'input window, operand 5, single buffered']
    #allocation9 [shape = 's32[1]{0}', space=sflag, size = 0x4, scoped, tag = 'scoped memory for tpu_custom_call.1']
    #allocation10 [shape = 'u8[4096]{0}', space=vmem, size = 0x1000, scoped, tag = 'output window, operand 0, single buffered']
    #allocation11 [shape = 'u8[4096]{0}', space=vmem, size = 0x1000, scoped, tag = 'output window, operand 1, single buffered']
    #allocation12 [shape = 's32[1]{0}', space=sflag, size = 0x4, scoped, tag = 'scoped memory for tpu_custom_call.1']
    %17 = vsyncpa [#allocation3], 0
    %18 = vsyncpa [#allocation6], 0
    %19 = vsyncpa [#allocation9], 0
    %20 = vsyncpa [#allocation4], 0
    %21 = vsyncpa [#allocation12], 0
    // Predicated region
    $region2: #{tpu_custom_call.1} parent=1 // pred_check
      _
    $region3: #{tpu_custom_call.1} parent=1 // pred_check_branch
      %23 = sbr.rel (0) target = $region5
    $region4: #{tpu_custom_call.1} parent=1 // pred_region
      %s25 = ssub.s32 128, 128
      %26 = vsyncadd [#allocation3], %s25
      %s28 = sshll.u32 [#allocation2], 4
      %s29 = int_to_ptr.vmem [resolvable:$true] %s28
      %31 = dma.hbm_to_vmem [thread:$0]  %s0, 128, %s29, [#allocation3]
    $region5: #{tpu_custom_call.1} parent=1 // pred_fallthru
      _
    // Predicated region
    $region6: #{tpu_custom_call.1} parent=1 // pred_check
      _
    $region7: #{tpu_custom_call.1} parent=1 // pred_check_branch
      %33 = sbr.rel (0) target = $region9
    $region8: #{tpu_custom_call.1} parent=1 // pred_region
      %s35 = ssub.s32 512, 512
      %36 = vsyncadd [#allocation6], %s35
      %s37 = sshll.u32 [#allocation5], 4
      %s38 = int_to_ptr.vmem [resolvable:$true] %s37
      %43 = dma.hbm_to_vmem [thread:$0]  %s1, 512, %s38, [#allocation6], 128, 128, 8
    $region9: #{tpu_custom_call.1} parent=1 // pred_fallthru
      _
    // Predicated region
    $region10: #{tpu_custom_call.1} parent=1 // pred_check
      _
    $region11: #{tpu_custom_call.1} parent=1 // pred_check_branch
      %45 = sbr.rel (0) target = $region13
    $region12: #{tpu_custom_call.1} parent=1 // pred_region
      _
    $region13: #{tpu_custom_call.1} parent=1 // pred_fallthru
      _
    // Predicated region
    $region14: #{tpu_custom_call.1} parent=1 // pred_check
      _
    $region15: #{tpu_custom_call.1} parent=1 // pred_check_branch
      %47 = sbr.rel (0) target = $region17
    $region16: #{tpu_custom_call.1} parent=1 // pred_region
      %s49 = ssub.s32 1024, 1024
      %50 = vsyncadd [#allocation6], %s49
      %s51 = sshll.u32 [#allocation7], 4
      %s52 = int_to_ptr.vmem [resolvable:$true] %s51
      %57 = dma.hbm_to_vmem [thread:$0]  %s3, 1024, %s52, [#allocation6], 128, 128, 8
    $region17: #{tpu_custom_call.1} parent=1 // pred_fallthru
      _
    // Predicated region
    $region18: #{tpu_custom_call.1} parent=1 // pred_check
      _
    $region19: #{tpu_custom_call.1} parent=1 // pred_check_branch
      %59 = sbr.rel (0) target = $region21
    $region20: #{tpu_custom_call.1} parent=1 // pred_region
      _
    $region21: #{tpu_custom_call.1} parent=1 // pred_fallthru
      _
    // Predicated region
    $region22: #{tpu_custom_call.1} parent=1 // pred_check
      _
    $region23: #{tpu_custom_call.1} parent=1 // pred_check_branch
      %61 = sbr.rel (0) target = $region25
    $region24: #{tpu_custom_call.1} parent=1 // pred_region
      %s63 = ssub.s32 1024, 1024
      %64 = vsyncadd [#allocation9], %s63
      %s65 = sshll.u32 [#allocation8], 4
      %s66 = int_to_ptr.vmem [resolvable:$true] %s65
      %71 = dma.hbm_to_vmem [thread:$0]  %s5, 1024, %s66, [#allocation9], 128, 128, 8
    $region25: #{tpu_custom_call.1} parent=1 // pred_fallthru
      _
    // Predicated region
    $region26: #{tpu_custom_call.1} parent=1 // pred_check
      _
    $region27: #{tpu_custom_call.1} parent=1 // pred_check_branch
      %73 = sbr.rel (0) target = $region29
    $region28: #{tpu_custom_call.1} parent=1 // pred_region
      _
    $region29: #{tpu_custom_call.1} parent=1 // pred_fallthru
      _
    // Predicated region
    $region30: #{tpu_custom_call.1} parent=1 // pred_check
      _
    $region31: #{tpu_custom_call.1} parent=1 // pred_check_branch
      %75 = sbr.rel (0) target = $region33
    $region32: #{tpu_custom_call.1} parent=1 // pred_region
      _
    $region33: #{tpu_custom_call.1} parent=1 // pred_fallthru
      _
    // Predicated region
    $region34: #{tpu_custom_call.1} parent=1 // pred_check
      _
    $region35: #{tpu_custom_call.1} parent=1 // pred_check_branch
      %77 = sbr.rel (0) target = $region37
    $region36: #{tpu_custom_call.1} parent=1 // pred_region
      _
    $region37: #{tpu_custom_call.1} parent=1 // pred_fallthru
      _
    // Predicated region
    $region38: #{tpu_custom_call.1} parent=1 // pred_check
      _
    $region39: #{tpu_custom_call.1} parent=1 // pred_check_branch
      %79 = sbr.rel (0) target = $region41
    $region40: #{tpu_custom_call.1} parent=1 // pred_region
      _
    $region41: #{tpu_custom_call.1} parent=1 // pred_fallthru
      _
    // Predicated region
    $region42: #{tpu_custom_call.1} parent=1 // pred_check
      _
    $region43: #{tpu_custom_call.1} parent=1 // pred_check_branch
      %81 = sbr.rel (0) target = $region45
    $region44: #{tpu_custom_call.1} parent=1 // pred_region
      %82 = dma.done [#allocation3], 128
    $region45: #{tpu_custom_call.1} parent=1 // pred_fallthru
      _
    // Predicated region
    $region46: #{tpu_custom_call.1} parent=1 // pred_check
      _
    $region47: #{tpu_custom_call.1} parent=1 // pred_check_branch
      %84 = sbr.rel (0) target = $region49
    $region48: #{tpu_custom_call.1} parent=1 // pred_region
      %85 = dma.done [#allocation6], 512
    $region49: #{tpu_custom_call.1} parent=1 // pred_fallthru
      _
    // Predicated region
    $region50: #{tpu_custom_call.1} parent=1 // pred_check
      _
    $region51: #{tpu_custom_call.1} parent=1 // pred_check_branch
      %87 = sbr.rel (0) target = $region53
    $region52: #{tpu_custom_call.1} parent=1 // pred_region
      %88 = dma.done [#allocation6], 1024
    $region53: #{tpu_custom_call.1} parent=1 // pred_fallthru
      _
    // Predicated region
    $region54: #{tpu_custom_call.1} parent=1 // pred_check
      _
    $region55: #{tpu_custom_call.1} parent=1 // pred_check_branch
      %90 = sbr.rel (0) target = $region57
    $region56: #{tpu_custom_call.1} parent=1 // pred_region
      %91 = dma.done [#allocation9], 1024
    $region57: #{tpu_custom_call.1} parent=1 // pred_fallthru
      _
    %v92 = vld [vmem:[#allocation2] sm:$0xff]
    %v93 = vld [vmem:[#allocation5] sm:$0xff]
    %v94 = vld [vmem:[#allocation5 + $0x8] sm:$0xff]
    %v95 = vld [vmem:[#allocation5 + $0x10] sm:$0xff]
    %v96 = vld [vmem:[#allocation5 + $0x18] sm:$0xff]
    %v97 = vld [vmem:[%s2] sm:$0x1]
    %v99 = vlaneseq
    %v100 = vshrl.u32 %v99, 7
    %v101 = vsub.s32 0, %v100
    %v102 = vrot.slane %v97, %v101
    %vm104 = vcmask 261120
    %v106 = vsel %vm104, %v92, 0
    %108 = vmatprep.subr.mxu0 0.0
    %109 = vmatpush1.msra.mxu0 %v93
    %110 = vmatprep.subr.mxu0 0.0
    %111 = vmatpush1.msra.mxu0 %v94
    %112 = vmatprep.subr.mxu0 0.0
    %113 = vmatpush1.msra.mxu0 %v95
    %114 = vmatprep.subr.mxu0 0.0
    %115 = vmatpush1.msra.mxu0 %v96
    %116 = vmatprep.subr.mxu0 0.0
    %117 = vmatpush1.msra.mxu0 0.0
    %118 = vmatprep.subr.mxu0 0.0
    %119 = vmatpush1.msra.mxu0 0.0
    %120 = vmatprep.subr.mxu0 0.0
    %121 = vmatpush1.msra.mxu0 0.0
    %122 = vmatprep.subr.mxu0 0.0
    %123 = vmatpush1.msra.mxu0 0.0
    %124 = vmatprep.subr.mxu0 0.0
    %125 = vmatpush1.msra.mxu0 0.0
    %126 = vmatprep.subr.mxu0 0.0
    %127 = vmatpush1.msra.mxu0 0.0
    %128 = vmatprep.subr.mxu0 0.0
    %129 = vmatpush1.msra.mxu0 0.0
    %130 = vmatprep.subr.mxu0 0.0
    %131 = vmatpush1.msra.mxu0 0.0
    %132 = vmatprep.subr.mxu0 0.0
    %133 = vmatpush1.msra.mxu0 0.0
    %134 = vmatprep.subr.mxu0 0.0
    %135 = vmatpush1.msra.mxu0 0.0
    %136 = vmatprep.subr.mxu0 0.0
    %137 = vmatpush1.msra.mxu0 0.0
    %138 = vmatprep.subr.mxu0 0.0
    %139 = vmatpush1.msra.mxu0 0.0
    %140 = vmatprep.subr.mxu0 0.0
    %141 = vmatpush1.msra.mxu0 0.0
    %142 = vmatprep.subr.mxu0 0.0
    %143 = vmatpush1.msra.mxu0 0.0
    %144 = vmatprep.subr.mxu0 0.0
    %145 = vmatpush1.msra.mxu0 0.0
    %146 = vmatprep.subr.mxu0 0.0
    %147 = vmatpush1.msra.mxu0 0.0
    %148 = vmatprep.subr.mxu0 0.0
    %149 = vmatpush1.msra.mxu0 0.0
    %150 = vmatprep.subr.mxu0 0.0
    %151 = vmatpush1.msra.mxu0 0.0
    %152 = vmatprep.subr.mxu0 0.0
    %153 = vmatpush1.msra.mxu0 0.0
    %154 = vmatprep.subr.mxu0 0.0
    %155 = vmatpush1.msra.mxu0 0.0
    %156 = vmatprep.subr.mxu0 0.0
    %157 = vmatpush1.msra.mxu0 0.0
    %158 = vmatprep.subr.mxu0 0.0
    %159 = vmatpush1.msra.mxu0 0.0
    %160 = vmatprep.subr.mxu0 0.0
    %161 = vmatpush1.msra.mxu0 0.0
    %162 = vmatprep.subr.mxu0 0.0
    %163 = vmatpush1.msra.mxu0 0.0
    %164 = vmatprep.subr.mxu0 0.0
    %165 = vmatpush1.msra.mxu0 0.0
    %166 = vmatprep.subr.mxu0 0.0
    %167 = vmatpush1.msra.mxu0 0.0
    %168 = vmatprep.subr.mxu0 0.0
    %169 = vmatpush1.msra.mxu0 0.0
    %170 = vmatprep.subr.mxu0 0.0
    %171 = vmatpush1.msra.mxu0 0.0
    %172 = vmatprep.mubr.f32.mxu0 0.0
    %173 = vmatmul.mubr.f32.gmra.mrb[0].mxu0 %v106
    %v174 = vpop.f32.mrb[0].mxu0
    %v175 = vadd.f32 %v102, %v174
    %v176 = vpop.f32.mrb[0].mxu0
    %177 = vdwg.mxu0
    %v178 = vtanh.pop %v175
    %v179 = vld [vmem:[#allocation7] sm:$0xff]
    %v180 = vld [vmem:[#allocation7 + $0x8] sm:$0xff]
    %v181 = vld [vmem:[#allocation7 + $0x10] sm:$0xff]
    %v182 = vld [vmem:[#allocation7 + $0x18] sm:$0xff]
    %v183 = vld [vmem:[#allocation7 + $0x20] sm:$0xff]
    %v184 = vld [vmem:[#allocation7 + $0x28] sm:$0xff]
    %v185 = vld [vmem:[#allocation7 + $0x30] sm:$0xff]
    %v186 = vld [vmem:[#allocation7 + $0x38] sm:$0xff]
    %v187 = vld [vmem:[%s4] sm:$0x1]
    %v189 = vlaneseq
    %v190 = vshrl.u32 %v189, 7
    %v191 = vsub.s32 0, %v190
    %v192 = vrot.slane %v187, %v191
    %vm194 = vcmask 523264
    %v196 = vsel %vm194, %v178, 0
    %198 = vmatprep.subr.mxu0 0.0
    %199 = vmatpush1.msra.mxu0 %v179
    %200 = vmatprep.subr.mxu0 0.0
    %201 = vmatpush1.msra.mxu0 %v180
    %202 = vmatprep.subr.mxu0 0.0
    %203 = vmatpush1.msra.mxu0 %v181
    %204 = vmatprep.subr.mxu0 0.0
    %205 = vmatpush1.msra.mxu0 %v182
    %206 = vmatprep.subr.mxu0 0.0
    %207 = vmatpush1.msra.mxu0 %v183
    %208 = vmatprep.subr.mxu0 0.0
    %209 = vmatpush1.msra.mxu0 %v184
    %210 = vmatprep.subr.mxu0 0.0
    %211 = vmatpush1.msra.mxu0 %v185
    %212 = vmatprep.subr.mxu0 0.0
    %213 = vmatpush1.msra.mxu0 %v186
    %214 = vmatprep.subr.mxu0 0.0
    %215 = vmatpush1.msra.mxu0 0.0
    %216 = vmatprep.subr.mxu0 0.0
    %217 = vmatpush1.msra.mxu0 0.0
    %218 = vmatprep.subr.mxu0 0.0
    %219 = vmatpush1.msra.mxu0 0.0
    %220 = vmatprep.subr.mxu0 0.0
    %221 = vmatpush1.msra.mxu0 0.0
    %222 = vmatprep.subr.mxu0 0.0
    %223 = vmatpush1.msra.mxu0 0.0
    %224 = vmatprep.subr.mxu0 0.0
    %225 = vmatpush1.msra.mxu0 0.0
    %226 = vmatprep.subr.mxu0 0.0
    %227 = vmatpush1.msra.mxu0 0.0
    %228 = vmatprep.subr.mxu0 0.0
    %229 = vmatpush1.msra.mxu0 0.0
    %230 = vmatprep.subr.mxu0 0.0
    %231 = vmatpush1.msra.mxu0 0.0
    %232 = vmatprep.subr.mxu0 0.0
    %233 = vmatpush1.msra.mxu0 0.0
    %234 = vmatprep.subr.mxu0 0.0
    %235 = vmatpush1.msra.mxu0 0.0
    %236 = vmatprep.subr.mxu0 0.0
    %237 = vmatpush1.msra.mxu0 0.0
    %238 = vmatprep.subr.mxu0 0.0
    %239 = vmatpush1.msra.mxu0 0.0
    %240 = vmatprep.subr.mxu0 0.0
    %241 = vmatpush1.msra.mxu0 0.0
    %242 = vmatprep.subr.mxu0 0.0
    %243 = vmatpush1.msra.mxu0 0.0
    %244 = vmatprep.subr.mxu0 0.0
    %245 = vmatpush1.msra.mxu0 0.0
    %246 = vmatprep.subr.mxu0 0.0
    %247 = vmatpush1.msra.mxu0 0.0
    %248 = vmatprep.subr.mxu0 0.0
    %249 = vmatpush1.msra.mxu0 0.0
    %250 = vmatprep.subr.mxu0 0.0
    %251 = vmatpush1.msra.mxu0 0.0
    %252 = vmatprep.subr.mxu0 0.0
    %253 = vmatpush1.msra.mxu0 0.0
    %254 = vmatprep.subr.mxu0 0.0
    %255 = vmatpush1.msra.mxu0 0.0
    %256 = vmatprep.subr.mxu0 0.0
    %257 = vmatpush1.msra.mxu0 0.0
    %258 = vmatprep.subr.mxu0 0.0
    %259 = vmatpush1.msra.mxu0 0.0
    %260 = vmatprep.subr.mxu0 0.0
    %261 = vmatpush1.msra.mxu0 0.0
    %262 = vmatprep.mubr.f32.mxu0 0.0
    %263 = vmatmul.mubr.f32.gmra.mrb[0].mxu0 %v196
    %v264 = vpop.f32.mrb[0].mxu0
    %v265 = vadd.f32 %v192, %v264
    %v266 = vpop.f32.mrb[0].mxu0
    %267 = vdwg.mxu0
    %v268 = vtanh.pop %v265
    %v269 = vld [vmem:[#allocation8] sm:$0xff]
    %v270 = vld [vmem:[#allocation8 + $0x8] sm:$0xff]
    %v271 = vld [vmem:[#allocation8 + $0x10] sm:$0xff]
    %v272 = vld [vmem:[#allocation8 + $0x18] sm:$0xff]
    %v273 = vld [vmem:[#allocation8 + $0x20] sm:$0xff]
    %v274 = vld [vmem:[#allocation8 + $0x28] sm:$0xff]
    %v275 = vld [vmem:[#allocation8 + $0x30] sm:$0xff]
    %v276 = vld [vmem:[#allocation8 + $0x38] sm:$0xff]
    %v277 = vld [vmem:[%s6] sm:$0x1]
    %v279 = vlaneseq
    %v280 = vshrl.u32 %v279, 7
    %v281 = vsub.s32 0, %v280
    %v282 = vrot.slane %v277, %v281
    %v285 = vsel %vm194, %v268, 0
    %287 = vmatprep.subr.mxu0 0.0
    %288 = vmatpush1.msra.mxu0 %v269
    %289 = vmatprep.subr.mxu0 0.0
    %290 = vmatpush1.msra.mxu0 %v270
    %291 = vmatprep.subr.mxu0 0.0
    %292 = vmatpush1.msra.mxu0 %v271
    %293 = vmatprep.subr.mxu0 0.0
    %294 = vmatpush1.msra.mxu0 %v272
    %295 = vmatprep.subr.mxu0 0.0
    %296 = vmatpush1.msra.mxu0 %v273
    %297 = vmatprep.subr.mxu0 0.0
    %298 = vmatpush1.msra.mxu0 %v274
    %299 = vmatprep.subr.mxu0 0.0
    %300 = vmatpush1.msra.mxu0 %v275
    %301 = vmatprep.subr.mxu0 0.0
    %302 = vmatpush1.msra.mxu0 %v276
    %303 = vmatprep.subr.mxu0 0.0
    %304 = vmatpush1.msra.mxu0 0.0
    %305 = vmatprep.subr.mxu0 0.0
    %306 = vmatpush1.msra.mxu0 0.0
    %307 = vmatprep.subr.mxu0 0.0
    %308 = vmatpush1.msra.mxu0 0.0
    %309 = vmatprep.subr.mxu0 0.0
    %310 = vmatpush1.msra.mxu0 0.0
    %311 = vmatprep.subr.mxu0 0.0
    %312 = vmatpush1.msra.mxu0 0.0
    %313 = vmatprep.subr.mxu0 0.0
    %314 = vmatpush1.msra.mxu0 0.0
    %315 = vmatprep.subr.mxu0 0.0
    %316 = vmatpush1.msra.mxu0 0.0
    %317 = vmatprep.subr.mxu0 0.0
    %318 = vmatpush1.msra.mxu0 0.0
    %319 = vmatprep.subr.mxu0 0.0
    %320 = vmatpush1.msra.mxu0 0.0
    %321 = vmatprep.subr.mxu0 0.0
    %322 = vmatpush1.msra.mxu0 0.0
    %323 = vmatprep.subr.mxu0 0.0
    %324 = vmatpush1.msra.mxu0 0.0
    %325 = vmatprep.subr.mxu0 0.0
    %326 = vmatpush1.msra.mxu0 0.0
    %327 = vmatprep.subr.mxu0 0.0
    %328 = vmatpush1.msra.mxu0 0.0
    %329 = vmatprep.subr.mxu0 0.0
    %330 = vmatpush1.msra.mxu0 0.0
    %331 = vmatprep.subr.mxu0 0.0
    %332 = vmatpush1.msra.mxu0 0.0
    %333 = vmatprep.subr.mxu0 0.0
    %334 = vmatpush1.msra.mxu0 0.0
    %335 = vmatprep.subr.mxu0 0.0
    %336 = vmatpush1.msra.mxu0 0.0
    %337 = vmatprep.subr.mxu0 0.0
    %338 = vmatpush1.msra.mxu0 0.0
    %339 = vmatprep.subr.mxu0 0.0
    %340 = vmatpush1.msra.mxu0 0.0
    %341 = vmatprep.subr.mxu0 0.0
    %342 = vmatpush1.msra.mxu0 0.0
    %343 = vmatprep.subr.mxu0 0.0
    %344 = vmatpush1.msra.mxu0 0.0
    %345 = vmatprep.subr.mxu0 0.0
    %346 = vmatpush1.msra.mxu0 0.0
    %347 = vmatprep.subr.mxu0 0.0
    %348 = vmatpush1.msra.mxu0 0.0
    %349 = vmatprep.subr.mxu0 0.0
    %350 = vmatpush1.msra.mxu0 0.0
    %351 = vmatprep.mubr.f32.mxu0 0.0
    %352 = vmatmul.mubr.f32.gmra.mrb[0].mxu0 %v285
    %v353 = vpop.f32.mrb[0].mxu0
    %v354 = vadd.f32 %v282, %v353
    %v355 = vpop.f32.mrb[0].mxu0
    %356 = vdwg.mxu0
    %v357 = vld [vmem:[%s7] sm:$0x1]
    %v358 = vmul.f32 %v357, 1.442695
    %v359 = vpow.pop %v358
    %v360 = vsub.f32 0.0, %v357
    %v361 = vmul.f32 %v360, 1.442695
    %v362 = vpow.pop %v361
    %v363 = vld [vmem:[%s8] sm:$0xff]
    %v365 = vlaneseq
    %v366 = vshrl.u32 %v365, 7
    %v367 = vsub.s32 0, %v366
    %v368 = vrot.slane %v359, %v367
    %v370 = vmul.f32 %v368, %v363
    %v371 = vadd.f32 %v354, %v370
    %372 = vst [vmem:[#allocation10] sm:$0xff] %v371
    %vm373 = vcmask 1040384
    %v374 = vsel %vm373, %v357, 0.0
    %375 = vadd.xlane.f32.xlu0 %v374
    %v376 = vpop.xlane.xlu0 %375
    %v377 = vrot.slane %v376, 4
    %v378 = vadd.f32 %v376, %v377
    %v379 = vrot.slane %v378, 2
    %v380 = vadd.f32 %v378, %v379
    %v381 = vrot.slane %v380, 1
    %v382 = vadd.f32 %v380, %v381
    %s383 = vtos %v382
    %s384 = ssub.f32 0.0, %s383
    %s385 = ssub.f32 %s384, 7.351508
    %v386 = vsub.f32 %v371, %v354
    %v388 = vlaneseq
    %v389 = vshrl.u32 %v388, 7
    %v390 = vsub.s32 0, %v389
    %v391 = vrot.slane %v362, %v390
    %v393 = vmul.f32 %v386, %v391
    %v394 = vmul.f32 %v393, %v393
    %395 = vadd.xlane.f32.xlu0 %v394
    %v396 = vpop.xlane.xlu0 %395
    %v397 = vmul.f32 %v396, -0.5
    %v398 = vstv %s385
    %v399 = vadd.f32 %v397, %v398
    %v400 = vld [vmem:[%s9] sm:$0xff]
    %v401 = vsub.f32 %v400, %v354
    %v402 = vmul.f32 %v401, %v391
    %v403 = vmul.f32 %v402, %v402
    %404 = vadd.xlane.f32.xlu0 %v403
    %v405 = vpop.xlane.xlu0 %404
    %v406 = vmul.f32 %v405, -0.5
    %v407 = vadd.f32 %v406, %v398
    %v408 = vlaneseq
    %v409 = vand.u32 %v408, 127
    %vm410 = vcmp.eq.s32.totalorder %v409, 0
    %vm411 = vcmp.eq.s32.totalorder %v409, 1
    %v412 = vsel %vm411, %v407, 0.0
    %v413 = vsel %vm410, %v399, %v412
    %414 = vst [vmem:[#allocation11] sm:$0xff] %v413
    // Predicated region
    $region58: #{tpu_custom_call.1} parent=1 // pred_check
      _
    $region59: #{tpu_custom_call.1} parent=1 // pred_check_branch
      %416 = sbr.rel (0) target = $region61
    $region60: #{tpu_custom_call.1} parent=1 // pred_region
      %s418 = ssub.s32 128, 128
      %419 = vsyncadd [#allocation4], %s418
      %s421 = sshll.u32 [#allocation10], 4
      %s422 = int_to_ptr.vmem [resolvable:$true] %s421
      %424 = dma.vmem_to_hbm [thread:$0]  %s422, 128, %s10, [#allocation4]
    $region61: #{tpu_custom_call.1} parent=1 // pred_fallthru
      _
    // Predicated region
    $region62: #{tpu_custom_call.1} parent=1 // pred_check
      _
    $region63: #{tpu_custom_call.1} parent=1 // pred_check_branch
      %426 = sbr.rel (0) target = $region65
    $region64: #{tpu_custom_call.1} parent=1 // pred_region
      %s428 = ssub.s32 128, 128
      %429 = vsyncadd [#allocation12], %s428
      %s431 = sshll.u32 [#allocation11], 4
      %s432 = int_to_ptr.vmem [resolvable:$true] %s431
      %434 = dma.vmem_to_hbm [thread:$0]  %s432, 128, %s11, [#allocation12]
    $region65: #{tpu_custom_call.1} parent=1 // pred_fallthru
      _
    // Predicated region
    $region66: #{tpu_custom_call.1} parent=1 // pred_check
      _
    $region67: #{tpu_custom_call.1} parent=1 // pred_check_branch
      %436 = sbr.rel (0) target = $region69
    $region68: #{tpu_custom_call.1} parent=1 // pred_region
      %437 = dma.done [#allocation4], 128
    $region69: #{tpu_custom_call.1} parent=1 // pred_fallthru
      _
    // Predicated region
    $region70: #{tpu_custom_call.1} parent=1 // pred_check
      _
    $region71: #{tpu_custom_call.1} parent=1 // pred_check_branch
      %439 = sbr.rel (0) target = $region73
    $region72: #{tpu_custom_call.1} parent=1 // pred_region
      %440 = dma.done [#allocation12], 128
    $region73: #{tpu_custom_call.1} parent=1 // pred_fallthru
      _
    %441 = vsyncpa [#allocation3], 1
    %442 = vsyncpa [#allocation6], 1
    %443 = vsyncpa [#allocation9], 1
    %444 = vsyncpa [#allocation4], 1
    %445 = vsyncpa [#allocation12], 1

</llo_original>
